<compile_context>
chip_gen: v6e
topology: v6e:2x2x1
jax: 0.10.0
libtpu: 0.0.40
codegen_flags: <defaults>
</compile_context>

<pallas_src>
import functools

import jax
import jax.numpy as jnp
from jax import lax
from jax.experimental import pallas as pl
from jax.experimental.pallas import tpu as pltpu


def _dice_tile_kernel(x_ref, t_ref, inter_ref, sp_ref, st_ref,
                      acc_i_ref, acc_p_ref, acc_t_ref, *, tile_s, s_total):
    """Per-(image, spatial-tile) softmax + one-hot partial sums.

    x_ref:  (C, TILE_S)  logits tile (class axis on sublanes, spatial on lanes)
    t_ref:  (1, TILE_S)  int32 target tile
    inter_ref / sp_ref / st_ref: (1, 1, 1) f32 per-image outputs
    acc_*_ref: (C, TILE_S) f32 vector accumulators (VMEM scratch)
    """
    j = pl.program_id(1)
    nj = pl.num_programs(1)

    @pl.when(j == 0)
    def _():
        acc_i_ref[...] = jnp.zeros_like(acc_i_ref)
        acc_p_ref[...] = jnp.zeros_like(acc_p_ref)
        acc_t_ref[...] = jnp.zeros_like(acc_t_ref)

    t = t_ref[...]                                            # (1, TILE_S) int32

    # Mask columns past the true spatial extent (tail tile reads garbage).
    col = j * tile_s + lax.broadcasted_iota(jnp.int32, t.shape, 1)
    valid = col < s_total                                     # (1, TILE_S) bool

    x = x_ref[...].astype(jnp.float32)                        # (C, TILE_S)
    x = jnp.where(valid, x, 0.0)                              # scrub garbage tail

    # Numerically stable softmax over the class (sublane) axis.
    m = jnp.max(x, axis=0, keepdims=True)                     # (1, TILE_S)
    e = jnp.exp(x - m)                                        # (C, TILE_S)
    denom = jnp.sum(e, axis=0, keepdims=True)                 # (1, TILE_S)
    p = e * pl.reciprocal(denom, approx=True)                 # (C, TILE_S)
    p = jnp.where(valid, p, 0.0)

    # one_hot(targets) along the class axis; invalid columns match nothing.
    cls = lax.broadcasted_iota(jnp.int32, x.shape, 0)         # (C, TILE_S)
    onehot = jnp.where(jnp.logical_and(cls == t, valid), 1.0, 0.0)

    # Pure-VPU vector accumulation; no per-step scalar reduction.
    acc_i_ref[...] += p * onehot
    acc_p_ref[...] += p
    acc_t_ref[...] += onehot

    # Collapse to per-image scalars only once, on the last spatial tile.
    @pl.when(j == nj - 1)
    def _():
        inter_ref[...] = jnp.sum(acc_i_ref[...]).reshape(1, 1, 1)
        sp_ref[...] = jnp.sum(acc_p_ref[...]).reshape(1, 1, 1)
        st_ref[...] = jnp.sum(acc_t_ref[...]).reshape(1, 1, 1)


def _choose_tile_s(s_total, num_classes, itemsize,
                   target_bytes=2 << 20, cap=32768):
    """Spatial tile size: ~2 MiB of logits per block, multiple of 128,
    capped so double-buffered inputs + accumulators fit v7x's smaller VMEM."""
    ts = (target_bytes // (num_classes * itemsize)) // 128 * 128
    ts = max(128, min(ts, cap))
    s_ceil = ((s_total + 127) // 128) * 128
    return min(ts, s_ceil)


@functools.partial(jax.jit, static_argnames=("smooth",))
def dice_loss(inputs, targets, smooth=1.0):
    """inputs: (N, C, H, W) float logits; targets: (N, H, W) int class ids."""
    N, C, H, W = inputs.shape
    S = H * W

    # Free, contiguous reshapes only -- no transpose / cast / pad HBM passes.
    x = inputs.reshape(N, C, S)
    t = targets.reshape(N, 1, S).astype(jnp.int32)

    tile_s = _choose_tile_s(S, C, x.dtype.itemsize)
    n_s_tiles = pl.cdiv(S, tile_s)

    kernel = functools.partial(_dice_tile_kernel, tile_s=tile_s, s_total=S)

    out_shape = jax.ShapeDtypeStruct((N, 1, 1), jnp.float32)
    out_spec = pl.BlockSpec((1, 1, 1), lambda n, j: (n, 0, 0))

    inter, s_p, s_t = pl.pallas_call(
        kernel,
        out_shape=(out_shape, out_shape, out_shape),
        grid_spec=pltpu.PrefetchScalarGridSpec(
            num_scalar_prefetch=0,
            grid=(N, n_s_tiles),
            in_specs=[
                pl.BlockSpec((None, C, tile_s), lambda n, j: (n, 0, j)),
                pl.BlockSpec((None, 1, tile_s), lambda n, j: (n, 0, j)),
            ],
            out_specs=(out_spec, out_spec, out_spec),
            scratch_shapes=[
                pltpu.VMEM((C, tile_s), jnp.float32),  # intersection acc
                pltpu.VMEM((C, tile_s), jnp.float32),  # sum(softmax) acc
                pltpu.VMEM((C, tile_s), jnp.float32),  # sum(one_hot) acc
            ],
        ),
        compiler_params=pltpu.CompilerParams(
            dimension_semantics=("parallel", "arbitrary")),
    )(x, t)

    intersection = jnp.sum(inter)
    dice = (2.0 * intersection + smooth) / (jnp.sum(s_p) + jnp.sum(s_t) + smooth)
    return 1.0 - dice


def dice_loss_ref(inputs, targets, smooth=1.0):
    """Pure-JAX reference mirroring the PyTorch module."""
    p = jax.nn.softmax(inputs.astype(jnp.float32), axis=1)
    onehot = jax.nn.one_hot(targets, inputs.shape[1], dtype=jnp.float32)
    onehot = jnp.transpose(onehot, (0, 3, 1, 2))
    pf = p.reshape(-1)
    tf = onehot.reshape(-1)
    inter = jnp.sum(pf * tf)
    dice = (2.0 * inter + smooth) / (jnp.sum(pf) + jnp.sum(tf) + smooth)
    return 1.0 - dice


if __name__ == "__main__":
    key = jax.random.PRNGKey(0)
    k1, k2 = jax.random.split(key)
    N, C, H, W = 2, 4, 16, 16
    inputs = jax.random.normal(k1, (N, C, H, W), dtype=jnp.float32)
    targets = jax.random.randint(k2, (N, H, W), 0, C, dtype=jnp.int32)

    loss = dice_loss(inputs, targets, smooth=1.0)
    jax.block_until_ready(loss)

    ref = dice_loss_ref(inputs, targets, smooth=1.0)
    # atol/rtol 1e-3: the EUP approximate reciprocal in the softmax adds a
    # ~2^-12 per-element relative error, far below this on the scalar loss.
    assert jnp.allclose(loss, ref, atol=1e-3, rtol=1e-3), (loss, ref)
    print("KERNEL_OK")
</pallas_src>

<mosaic_0001>
module attributes {stable_mosaic.version = 11 : i64} {
  func.func @_dice_tile_kernel(%arg0: i32, %arg1: i32, %arg2: memref<1x4x256xf32, #tpu.memory_space<vmem>>, %arg3: memref<1x1x256xi32, #tpu.memory_space<vmem>>, %arg4: memref<1x1x1xf32, #tpu.memory_space<vmem>>, %arg5: memref<1x1x1xf32, #tpu.memory_space<vmem>>, %arg6: memref<1x1x1xf32, #tpu.memory_space<vmem>>, %arg7: memref<4x256xf32, #tpu.memory_space<vmem>>, %arg8: memref<4x256xf32, #tpu.memory_space<vmem>>, %arg9: memref<4x256xf32, #tpu.memory_space<vmem>>) attributes {dimension_semantics = [#tpu.dimension_semantics<parallel>, #tpu.dimension_semantics<arbitrary>], iteration_bounds = array<i64: 2, 1>, scalar_prefetch = 0 : i64, scratch_operands = 3 : i64, tpu.core_type = #tpu.core_type<tc>, window_params = [{transform_indices = @transform_0, window_bounds = array<i64: 1, 4, 256>}, {transform_indices = @transform_1, window_bounds = array<i64: 1, 1, 256>}, {transform_indices = @transform_2, window_bounds = array<i64: 1, 1, 1>}, {transform_indices = @transform_3, window_bounds = array<i64: 1, 1, 1>}, {transform_indices = @transform_4, window_bounds = array<i64: 1, 1, 1>}]} {
    %c0_i32 = arith.constant 0 : i32
    %0 = arith.cmpi eq, %arg1, %c0_i32 : i32
    %1 = arith.extui %0 : i1 to i32
    %c0_i32_0 = arith.constant 0 : i32
    %2 = arith.cmpi ne, %1, %c0_i32_0 : i32
    scf.if %2 {
      %cst_26 = arith.constant 0.000000e+00 : f32
      %52 = vector.broadcast %cst_26 : f32 to vector<4x256xf32>
      %c0_27 = arith.constant 0 : index
      %c0_28 = arith.constant 0 : index
      %53 = vector.load %arg7[%c0_27, %c0_28] : memref<4x256xf32, #tpu.memory_space<vmem>>, vector<4x256xf32>
      tpu.vector_store %arg7[%c0_27, %c0_28], %52 {strides = array<i32>} : memref<4x256xf32, #tpu.memory_space<vmem>>, vector<4x256xf32>,
      %cst_29 = arith.constant 0.000000e+00 : f32
      %54 = vector.broadcast %cst_29 : f32 to vector<4x256xf32>
      %c0_30 = arith.constant 0 : index
      %c0_31 = arith.constant 0 : index
      %55 = vector.load %arg8[%c0_30, %c0_31] : memref<4x256xf32, #tpu.memory_space<vmem>>, vector<4x256xf32>
      tpu.vector_store %arg8[%c0_30, %c0_31], %54 {strides = array<i32>} : memref<4x256xf32, #tpu.memory_space<vmem>>, vector<4x256xf32>,
      %cst_32 = arith.constant 0.000000e+00 : f32
      %56 = vector.broadcast %cst_32 : f32 to vector<4x256xf32>
      %c0_33 = arith.constant 0 : index
      %c0_34 = arith.constant 0 : index
      %57 = vector.load %arg9[%c0_33, %c0_34] : memref<4x256xf32, #tpu.memory_space<vmem>>, vector<4x256xf32>
      tpu.vector_store %arg9[%c0_33, %c0_34], %56 {strides = array<i32>} : memref<4x256xf32, #tpu.memory_space<vmem>>, vector<4x256xf32>,
    } else {
    }
    %c0 = arith.constant 0 : index
    %c0_1 = arith.constant 0 : index
    %c0_2 = arith.constant 0 : index
    %3 = vector.load %arg3[%c0, %c0_1, %c0_2] : memref<1x1x256xi32, #tpu.memory_space<vmem>>, vector<1x1x256xi32>
    %4 = vector.shape_cast %3 : vector<1x1x256xi32> to vector<1x256xi32>
    %c256_i32 = arith.constant 256 : i32
    %5 = arith.muli %arg1, %c256_i32 : i32
    %6 = tpu.iota {dimensions = array<i32: 1>} : vector<1x256xi32>
    %7 = vector.broadcast %5 : i32 to vector<1x256xi32>
    %8 = arith.addi %7, %6 : vector<1x256xi32>
    %c256_i32_3 = arith.constant 256 : i32
    %9 = vector.broadcast %c256_i32_3 : i32 to vector<1x256xi32>
    %10 = arith.cmpi slt, %8, %9 : vector<1x256xi32>
    %c0_4 = arith.constant 0 : index
    %c0_5 = arith.constant 0 : index
    %c0_6 = arith.constant 0 : index
    %11 = vector.load %arg2[%c0_4, %c0_5, %c0_6] : memref<1x4x256xf32, #tpu.memory_space<vmem>>, vector<1x4x256xf32>
    %12 = vector.shape_cast %11 : vector<1x4x256xf32> to vector<4x256xf32>
    %cst = arith.constant 0.000000e+00 : f32
    %13 = vector.shape_cast %10 : vector<1x256xi1> to vector<1x256xi1>
    %14 = vector.broadcast %13 : vector<1x256xi1> to vector<4x256xi1>
    %15 = vector.broadcast %cst : f32 to vector<4x256xf32>
    %16 = arith.select %14, %12, %15 : vector<4x256xi1>, vector<4x256xf32>
    %cst_7 = arith.constant dense<0xFF800000> : vector<256xf32>
    %17 = vector.multi_reduction <maximumf>, %16, %cst_7 [0] : vector<4x256xf32> to vector<256xf32>
    %18 = vector.shape_cast %17 : vector<256xf32> to vector<1x256xf32>
    %19 = vector.broadcast %18 : vector<1x256xf32> to vector<4x256xf32>
    %20 = arith.subf %16, %19 : vector<4x256xf32>
    %21 = math.exp %20 : vector<4x256xf32>
    %cst_8 = arith.constant dense<0.000000e+00> : vector<256xf32>
    %22 = vector.multi_reduction <add>, %21, %cst_8 [0] : vector<4x256xf32> to vector<256xf32>
    %23 = vector.shape_cast %22 : vector<256xf32> to vector<1x256xf32>
    %24 = tpu.reciprocal %23 {approx = true} : vector<1x256xf32> -> vector<1x256xf32>
    %25 = vector.broadcast %24 : vector<1x256xf32> to vector<4x256xf32>
    %26 = arith.mulf %21, %25 : vector<4x256xf32>
    %cst_9 = arith.constant 0.000000e+00 : f32
    %27 = vector.shape_cast %10 : vector<1x256xi1> to vector<1x256xi1>
    %28 = vector.broadcast %27 : vector<1x256xi1> to vector<4x256xi1>
    %29 = vector.broadcast %cst_9 : f32 to vector<4x256xf32>
    %30 = arith.select %28, %26, %29 : vector<4x256xi1>, vector<4x256xf32>
    %31 = tpu.iota {dimensions = array<i32: 0>} : vector<4x256xi32>
    %32 = vector.broadcast %4 : vector<1x256xi32> to vector<4x256xi32>
    %33 = arith.cmpi eq, %31, %32 : vector<4x256xi32>
    %34 = vector.broadcast %10 : vector<1x256xi1> to vector<4x256xi1>
    %35 = arith.andi %33, %34 : vector<4x256xi1>
    %cst_10 = arith.constant 1.000000e+00 : f32
    %cst_11 = arith.constant 0.000000e+00 : f32
    %36 = vector.broadcast %cst_10 : f32 to vector<4x256xf32>
    %37 = vector.broadcast %cst_11 : f32 to vector<4x256xf32>
    %38 = arith.select %35, %36, %37 : vector<4x256xi1>, vector<4x256xf32>
    %c0_12 = arith.constant 0 : index
    %c0_13 = arith.constant 0 : index
    %39 = vector.load %arg7[%c0_12, %c0_13] : memref<4x256xf32, #tpu.memory_space<vmem>>, vector<4x256xf32>
    %40 = arith.mulf %30, %38 : vector<4x256xf32>
    %41 = arith.addf %39, %40 : vector<4x256xf32>
    %c0_14 = arith.constant 0 : index
    %c0_15 = arith.constant 0 : index
    %42 = vector.load %arg7[%c0_14, %c0_15] : memref<4x256xf32, #tpu.memory_space<vmem>>, vector<4x256xf32>
    tpu.vector_store %arg7[%c0_14, %c0_15], %41 {strides = array<i32>} : memref<4x256xf32, #tpu.memory_space<vmem>>, vector<4x256xf32>,
    %c0_16 = arith.constant 0 : index
    %c0_17 = arith.constant 0 : index
    %43 = vector.load %arg8[%c0_16, %c0_17] : memref<4x256xf32, #tpu.memory_space<vmem>>, vector<4x256xf32>
    %44 = arith.addf %43, %30 : vector<4x256xf32>
    %c0_18 = arith.constant 0 : index
    %c0_19 = arith.constant 0 : index
    %45 = vector.load %arg8[%c0_18, %c0_19] : memref<4x256xf32, #tpu.memory_space<vmem>>, vector<4x256xf32>
    tpu.vector_store %arg8[%c0_18, %c0_19], %44 {strides = array<i32>} : memref<4x256xf32, #tpu.memory_space<vmem>>, vector<4x256xf32>,
    %c0_20 = arith.constant 0 : index
    %c0_21 = arith.constant 0 : index
    %46 = vector.load %arg9[%c0_20, %c0_21] : memref<4x256xf32, #tpu.memory_space<vmem>>, vector<4x256xf32>
    %47 = arith.addf %46, %38 : vector<4x256xf32>
    %c0_22 = arith.constant 0 : index
    %c0_23 = arith.constant 0 : index
    %48 = vector.load %arg9[%c0_22, %c0_23] : memref<4x256xf32, #tpu.memory_space<vmem>>, vector<4x256xf32>
    tpu.vector_store %arg9[%c0_22, %c0_23], %47 {strides = array<i32>} : memref<4x256xf32, #tpu.memory_space<vmem>>, vector<4x256xf32>,
    %c0_i32_24 = arith.constant 0 : i32
    %49 = arith.cmpi eq, %arg1, %c0_i32_24 : i32
    %50 = arith.extui %49 : i1 to i32
    %c0_i32_25 = arith.constant 0 : i32
    %51 = arith.cmpi ne, %50, %c0_i32_25 : i32
    scf.if %51 {
      %c0_26 = arith.constant 0 : index
      %c0_27 = arith.constant 0 : index
      %52 = vector.load %arg7[%c0_26, %c0_27] : memref<4x256xf32, #tpu.memory_space<vmem>>, vector<4x256xf32>
      %53 = vector.shape_cast %52 : vector<4x256xf32> to vector<1x4x256xf32>
      %cst_28 = arith.constant dense<0.000000e+00> : vector<1xf32>
      %54 = vector.multi_reduction <add>, %53, %cst_28 [1, 2] : vector<1x4x256xf32> to vector<1xf32>
      %55 = vector.shape_cast %54 : vector<1xf32> to vector<1x1x1xf32>
      %56 = vector.extract %55[0, 0, 0] : f32 from vector<1x1x1xf32>
      %57 = vector.broadcast %56 : f32 to vector<1x1x1xf32>
      %c0_29 = arith.constant 0 : index
      %c0_30 = arith.constant 0 : index
      %c0_31 = arith.constant 0 : index
      %58 = vector.load %arg4[%c0_29, %c0_30, %c0_31] : memref<1x1x1xf32, #tpu.memory_space<vmem>>, vector<1x1x1xf32>
      tpu.vector_store %arg4[%c0_29, %c0_30, %c0_31], %57 {strides = array<i32>} : memref<1x1x1xf32, #tpu.memory_space<vmem>>, vector<1x1x1xf32>,
      %c0_32 = arith.constant 0 : index
      %c0_33 = arith.constant 0 : index
      %59 = vector.load %arg8[%c0_32, %c0_33] : memref<4x256xf32, #tpu.memory_space<vmem>>, vector<4x256xf32>
      %60 = vector.shape_cast %59 : vector<4x256xf32> to vector<1x4x256xf32>
      %cst_34 = arith.constant dense<0.000000e+00> : vector<1xf32>
      %61 = vector.multi_reduction <add>, %60, %cst_34 [1, 2] : vector<1x4x256xf32> to vector<1xf32>
      %62 = vector.shape_cast %61 : vector<1xf32> to vector<1x1x1xf32>
      %63 = vector.extract %62[0, 0, 0] : f32 from vector<1x1x1xf32>
      %64 = vector.broadcast %63 : f32 to vector<1x1x1xf32>
      %c0_35 = arith.constant 0 : index
      %c0_36 = arith.constant 0 : index
      %c0_37 = arith.constant 0 : index
      %65 = vector.load %arg5[%c0_35, %c0_36, %c0_37] : memref<1x1x1xf32, #tpu.memory_space<vmem>>, vector<1x1x1xf32>
      tpu.vector_store %arg5[%c0_35, %c0_36, %c0_37], %64 {strides = array<i32>} : memref<1x1x1xf32, #tpu.memory_space<vmem>>, vector<1x1x1xf32>,
      %c0_38 = arith.constant 0 : index
      %c0_39 = arith.constant 0 : index
      %66 = vector.load %arg9[%c0_38, %c0_39] : memref<4x256xf32, #tpu.memory_space<vmem>>, vector<4x256xf32>
      %67 = vector.shape_cast %66 : vector<4x256xf32> to vector<1x4x256xf32>
      %cst_40 = arith.constant dense<0.000000e+00> : vector<1xf32>
      %68 = vector.multi_reduction <add>, %67, %cst_40 [1, 2] : vector<1x4x256xf32> to vector<1xf32>
      %69 = vector.shape_cast %68 : vector<1xf32> to vector<1x1x1xf32>
      %70 = vector.extract %69[0, 0, 0] : f32 from vector<1x1x1xf32>
      %71 = vector.broadcast %70 : f32 to vector<1x1x1xf32>
      %c0_41 = arith.constant 0 : index
      %c0_42 = arith.constant 0 : index
      %c0_43 = arith.constant 0 : index
      %72 = vector.load %arg6[%c0_41, %c0_42, %c0_43] : memref<1x1x1xf32, #tpu.memory_space<vmem>>, vector<1x1x1xf32>
      tpu.vector_store %arg6[%c0_41, %c0_42, %c0_43], %71 {strides = array<i32>} : memref<1x1x1xf32, #tpu.memory_space<vmem>>, vector<1x1x1xf32>,
    } else {
    }
    return
  }
  func.func @transform_0(%arg0: i32, %arg1: i32) -> (i32, i32, i32) {
    %c0_i32 = arith.constant 0 : i32
    %c0_i32_0 = arith.constant 0 : i32
    return %arg0, %c0_i32, %arg1 : i32, i32, i32
  }
  func.func @transform_1(%arg0: i32, %arg1: i32) -> (i32, i32, i32) {
    %c0_i32 = arith.constant 0 : i32
    %c0_i32_0 = arith.constant 0 : i32
    return %arg0, %c0_i32, %arg1 : i32, i32, i32
  }
  func.func @transform_2(%arg0: i32, %arg1: i32) -> (i32, i32, i32) {
    %c0_i32 = arith.constant 0 : i32
    %c0_i32_0 = arith.constant 0 : i32
    %c0_i32_1 = arith.constant 0 : i32
    return %arg0, %c0_i32, %c0_i32_0 : i32, i32, i32
  }
  func.func @transform_3(%arg0: i32, %arg1: i32) -> (i32, i32, i32) {
    %c0_i32 = arith.constant 0 : i32
    %c0_i32_0 = arith.constant 0 : i32
    %c0_i32_1 = arith.constant 0 : i32
    return %arg0, %c0_i32, %c0_i32_0 : i32, i32, i32
  }
  func.func @transform_4(%arg0: i32, %arg1: i32) -> (i32, i32, i32) {
    %c0_i32 = arith.constant 0 : i32
    %c0_i32_0 = arith.constant 0 : i32
    %c0_i32_1 = arith.constant 0 : i32
    return %arg0, %c0_i32, %c0_i32_0 : i32, i32, i32
  }
}

</mosaic_0001>

<llo_original>
// kernel: dice_loss.1
$region0: #{dice_loss.1}
  #allocation0 [shape = 'u32[]', space=smem, size = 0x4, offset = 0x4, fixed_abs, tag = 'smem constant byte address 0x4 - core index']
  #allocation1 [shape = 'u32[144,128]{1,0:T(1,128)}', space=vmem, size = 0x12000, scoped, tag = 'internal scratch']
  #allocation2 [shape = 'f32[4,256]{1,0:T(4,128)}', space=vmem, size = 0x1000, scoped, tag = 'scratch operand']
  #allocation3 [shape = 'f32[4,256]{1,0:T(4,128)}', space=vmem, size = 0x1000, scoped, tag = 'scratch operand']
  #allocation4 [shape = 'f32[4,256]{1,0:T(4,128)}', space=vmem, size = 0x1000, scoped, tag = 'scratch operand']
  %s0 = inlined_call_operand.vmem [shape: f32[2,4,256], index: 0, kind: input, shape index: {}]
  %s1 = inlined_call_operand.vmem [shape: s32[2,1,256], index: 1, kind: input, shape index: {}]
  %s2 = inlined_call_operand.vmem [shape: f32[2,1,1], index: 2, kind: output, shape index: {0}]
  %s3 = inlined_call_operand.vmem [shape: f32[2,1,1], index: 3, kind: output, shape index: {1}]
  %s4 = inlined_call_operand.vmem [shape: f32[2,1,1], index: 4, kind: output, shape index: {2}]
  %5 = xla_tuple %s2, %s3, %s4
  %s6 = sld [smem:[#allocation0]]
  $region65: #{dice_loss.1} parent=0
    _
  %s8 = ssub.s32 1, %s6
  %s9 = scalar_select 0, %s8, %s6
  loop: start=0, step=1, limit=4
  $region2: #{dice_loss.1} parent=0 // loop_pre_header
    _
  $region3: #{dice_loss.1} parent=0 // loop_header
    %s11 = sphi 0, %s15
    %p12 = scmp.ge.s32.totalorder %s11, 4
    %s18 = sphi 0, %s30
    %s19 = sphi 0, %s26
    %s20 = sphi 0, %s18
    %s21 = sphi 0, %s19
    %s22 = sphi 0, %s20
    %s23 = sphi 0, %s21
    %s35 = sphi 0, %s37
    %s38 = sphi 0, %s35
    %s39 = sphi 0, %s38
    %s55 = sphi 0, %s39
    %s63 = sphi 0, %s65
    %s66 = sphi 0, %s63
    %s67 = sphi 0, %s66
    %s83 = sphi 0, %s67
    %s89 = sphi 0, %s91
    %s92 = sphi 0, %s89
    %s93 = sphi 0, %s92
    %s109 = sphi 0, %s93
    %s115 = sphi 0, %s117
    %s118 = sphi 0, %s115
    %s119 = sphi 0, %s118
    %s135 = sphi 0, %s119
    %s141 = sphi 0, %s143
    %s144 = sphi 0, %s141
    %s145 = sphi 0, %s144
    %s161 = sphi 0, %s145
  $region4: #{dice_loss.1} parent=0 // loop_header_branch
    %14 = sbr.rel (%p12) target = $region8
  $region5: #{dice_loss.1} parent=0 // loop_body
    %s16 = ssub.s32 %s11, 1
    %s17 = ssub.s32 %s11, 2
    %s24 = sadd.s32 1, %s19
    %p25 = scmp.ge.s32.totalorder %s24, 1
    %s26 = scalar_select %p25, 0, %s24
    %s27 = sadd.s32 1, %s18
    %s28 = scalar_select %p25, %s27, %s18
    %p29 = scmp.ge.s32.totalorder %s28, 2
    %s30 = scalar_select %p29, 0, %s28
    %s31 = ssub.s32 %s18, %s30
    %s32 = ssub.s32 %s19, %s26
    %s33 = sor.u32 %s31, %s32
    %p34 = scmp.eq.s32.totalorder %s33, 0
    %s36 = sadd.s32 %s35, 1
    %s37 = scalar_select %p34, %s35, %s36
    %p40 = pneg %p34
    %p41 = scmp.eq.s32.totalorder %s11, 1
    %p42 = por %p40, %p41
    %p43 = scmp.ne.s32.totalorder %s35, %s38
    %p44 = scmp.eq.s32.totalorder %s11, 0
    %p45 = por %p43, %p44
    %p46 = scmp.ne.s32.totalorder %s35, %s38
    %p47 = scmp.eq.s32.totalorder %s16, 1
    %p48 = por %p46, %p47
    %p49 = scmp.ne.s32.totalorder %s38, %s39
    %p50 = scmp.eq.s32.totalorder %s16, 0
    %p51 = por %p49, %p50
    %p52 = scmp.ne.s32.totalorder %s38, %s39
    %p53 = scmp.eq.s32.totalorder %s17, 1
    %p54 = por %p52, %p53
    %p56 = scmp.ne.s32.totalorder %s39, %s55
    %p57 = scmp.eq.s32.totalorder %s17, 0
    %p58 = por %p56, %p57
    %s59 = ssub.s32 %s18, %s30
    %s60 = ssub.s32 %s19, %s26
    %s61 = sor.u32 %s59, %s60
    %p62 = scmp.eq.s32.totalorder %s61, 0
    %s64 = sadd.s32 %s63, 1
    %s65 = scalar_select %p62, %s63, %s64
    %p68 = pneg %p62
    %p69 = scmp.eq.s32.totalorder %s11, 1
    %p70 = por %p68, %p69
    %p71 = scmp.ne.s32.totalorder %s63, %s66
    %p72 = scmp.eq.s32.totalorder %s11, 0
    %p73 = por %p71, %p72
    %p74 = scmp.ne.s32.totalorder %s63, %s66
    %p75 = scmp.eq.s32.totalorder %s16, 1
    %p76 = por %p74, %p75
    %p77 = scmp.ne.s32.totalorder %s66, %s67
    %p78 = scmp.eq.s32.totalorder %s16, 0
    %p79 = por %p77, %p78
    %p80 = scmp.ne.s32.totalorder %s66, %s67
    %p81 = scmp.eq.s32.totalorder %s17, 1
    %p82 = por %p80, %p81
    %p84 = scmp.ne.s32.totalorder %s67, %s83
    %p85 = scmp.eq.s32.totalorder %s17, 0
    %p86 = por %p84, %p85
    %s87 = ssub.s32 %s18, %s30
    %p88 = scmp.eq.s32.totalorder %s87, 0
    %s90 = sadd.s32 %s89, 1
    %s91 = scalar_select %p88, %s89, %s90
    %p94 = pneg %p88
    %p95 = scmp.eq.s32.totalorder %s11, 1
    %p96 = por %p94, %p95
    %p97 = scmp.ne.s32.totalorder %s89, %s92
    %p98 = scmp.eq.s32.totalorder %s11, 0
    %p99 = por %p97, %p98
    %p100 = scmp.ne.s32.totalorder %s89, %s92
    %p101 = scmp.eq.s32.totalorder %s16, 1
    %p102 = por %p100, %p101
    %p103 = scmp.ne.s32.totalorder %s92, %s93
    %p104 = scmp.eq.s32.totalorder %s16, 0
    %p105 = por %p103, %p104
    %p106 = scmp.ne.s32.totalorder %s92, %s93
    %p107 = scmp.eq.s32.totalorder %s17, 1
    %p108 = por %p106, %p107
    %p110 = scmp.ne.s32.totalorder %s93, %s109
    %p111 = scmp.eq.s32.totalorder %s17, 0
    %p112 = por %p110, %p111
    %s113 = ssub.s32 %s18, %s30
    %p114 = scmp.eq.s32.totalorder %s113, 0
    %s116 = sadd.s32 %s115, 1
    %s117 = scalar_select %p114, %s115, %s116
    %p120 = pneg %p114
    %p121 = scmp.eq.s32.totalorder %s11, 1
    %p122 = por %p120, %p121
    %p123 = scmp.ne.s32.totalorder %s115, %s118
    %p124 = scmp.eq.s32.totalorder %s11, 0
    %p125 = por %p123, %p124
    %p126 = scmp.ne.s32.totalorder %s115, %s118
    %p127 = scmp.eq.s32.totalorder %s16, 1
    %p128 = por %p126, %p127
    %p129 = scmp.ne.s32.totalorder %s118, %s119
    %p130 = scmp.eq.s32.totalorder %s16, 0
    %p131 = por %p129, %p130
    %p132 = scmp.ne.s32.totalorder %s118, %s119
    %p133 = scmp.eq.s32.totalorder %s17, 1
    %p134 = por %p132, %p133
    %p136 = scmp.ne.s32.totalorder %s119, %s135
    %p137 = scmp.eq.s32.totalorder %s17, 0
    %p138 = por %p136, %p137
    %s139 = ssub.s32 %s18, %s30
    %p140 = scmp.eq.s32.totalorder %s139, 0
    %s142 = sadd.s32 %s141, 1
    %s143 = scalar_select %p140, %s141, %s142
    %p146 = pneg %p140
    %p147 = scmp.eq.s32.totalorder %s11, 1
    %p148 = por %p146, %p147
    %p149 = scmp.ne.s32.totalorder %s141, %s144
    %p150 = scmp.eq.s32.totalorder %s11, 0
    %p151 = por %p149, %p150
    %p152 = scmp.ne.s32.totalorder %s141, %s144
    %p153 = scmp.eq.s32.totalorder %s16, 1
    %p154 = por %p152, %p153
    %p155 = scmp.ne.s32.totalorder %s144, %s145
    %p156 = scmp.eq.s32.totalorder %s16, 0
    %p157 = por %p155, %p156
    %p158 = scmp.ne.s32.totalorder %s144, %s145
    %p159 = scmp.eq.s32.totalorder %s17, 1
    %p160 = por %p158, %p159
    %p162 = scmp.ne.s32.totalorder %s145, %s161
    %p163 = scmp.eq.s32.totalorder %s17, 0
    %p164 = por %p162, %p163
    %p165 = scmp.le.s32.totalorder 1, %s11
    %p166 = scmp.lt.s32.totalorder %s11, 3
    %p167 = pnand %p165, %p166
    %p168 = pneg %p167
    // Predicated region
    $region9: #{dice_loss.1} parent=5 // pred_check
      _
    $region10: #{dice_loss.1} parent=5 // pred_check_branch
      %170 = sbr.rel (%p167) target = $region12
    $region11: #{dice_loss.1} parent=5 // pred_region
      %s171 = ssub.s32 %s11, 1
    $region12: #{dice_loss.1} parent=5 // pred_fallthru
      _
    %p172 = scmp.lt.s32.totalorder %s11, 2
    // Predicated region
    $region13: #{dice_loss.1} parent=5 // pred_check
      %p173 = pneg %p172
    $region14: #{dice_loss.1} parent=5 // pred_check_branch
      %175 = sbr.rel (%p173) target = $region16
    $region15: #{dice_loss.1} parent=5 // pred_region
      // Predicated region
      $region17: #{dice_loss.1} parent=15 // pred_check
        %p176 = pneg %p45
      $region18: #{dice_loss.1} parent=15 // pred_check_branch
        %178 = sbr.rel (%p176) target = $region20
      $region19: #{dice_loss.1} parent=15 // pred_region
        %s179 = smul.u32 2, %s19
        %p180 = scmp.lt.s32.totalorder %s18, 1
        %s181 = scalar_select %p180, %s18, 1
        %p182 = scmp.lt.s32.totalorder %s179, 1
        %s183 = scalar_select %p182, %s179, 1
        %s184 = smul.addr %s181, 2
        %s185 = sadd.s32 %s183, %s184
        %s186 = smul.addr %s185, 4
        %s187 = scalar_lea.vmem %s0, %s186
        %s188 = smul.u32 2, %s19
      $region20: #{dice_loss.1} parent=15 // pred_fallthru
        _
      // Predicated region
      $region21: #{dice_loss.1} parent=15 // pred_check
        %p189 = pneg %p73
      $region22: #{dice_loss.1} parent=15 // pred_check_branch
        %191 = sbr.rel (%p189) target = $region24
      $region23: #{dice_loss.1} parent=15 // pred_region
        %s192 = smul.u32 2, %s19
        %p193 = scmp.lt.s32.totalorder %s18, 1
        %s194 = scalar_select %p193, %s18, 1
        %p195 = scmp.lt.s32.totalorder %s192, 1
        %s196 = scalar_select %p195, %s192, 1
        %s197 = smul.addr %s194, 2
        %s198 = sadd.s32 %s196, %s197
        %s199 = scalar_lea.vmem %s1, %s198
        %s200 = smul.u32 2, %s19
      $region24: #{dice_loss.1} parent=15 // pred_fallthru
        _
    $region16: #{dice_loss.1} parent=5 // pred_fallthru
      _
    %p201 = scmp.le.s32.totalorder 1, %s11
    %p202 = scmp.lt.s32.totalorder %s11, 3
    %p203 = pnand %p201, %p202
    %p204 = pneg %p203
    // Predicated region
    $region25: #{dice_loss.1} parent=5 // pred_check
      _
    $region26: #{dice_loss.1} parent=5 // pred_check_branch
      %206 = sbr.rel (%p203) target = $region28
    $region27: #{dice_loss.1} parent=5 // pred_region
      %s207 = ssub.s32 %s11, 1
      %s208 = smul.u32 2, %s21
      %p209 = scmp.lt.s32.totalorder %s20, 1
      %s210 = scalar_select %p209, %s20, 1
      %p211 = scmp.lt.s32.totalorder %s208, 1
      %s212 = scalar_select %p211, %s208, 1
      %s213 = smul.addr %s210, 2
      %s214 = sadd.s32 %s212, %s213
      %s215 = smul.addr %s214, 4
      %s216 = scalar_lea.vmem %s0, %s215
      %p217 = pneg %p51
      %p218 = pneg %p48
      %s219 = smul.u32 2, %s21
      %p220 = scmp.lt.s32.totalorder %s20, 1
      %s221 = scalar_select %p220, %s20, 1
      %p222 = scmp.lt.s32.totalorder %s219, 1
      %s223 = scalar_select %p222, %s219, 1
      %s224 = smul.addr %s221, 2
      %s225 = sadd.s32 %s223, %s224
      %s226 = scalar_lea.vmem %s1, %s225
      %p227 = pneg %p79
      %p228 = pneg %p76
      %p229 = pneg %p105
      %p230 = pneg %p102
      %p231 = scmp.lt.s32.totalorder %s20, 1
      %s232 = scalar_select %p231, %s20, 1
      %s233 = scalar_lea.vmem %s2, %s232
      %p234 = pneg %p131
      %p235 = pneg %p128
      %p236 = scmp.lt.s32.totalorder %s20, 1
      %s237 = scalar_select %p236, %s20, 1
      %s238 = scalar_lea.vmem %s3, %s237
      %p239 = pneg %p157
      %p240 = pneg %p154
      %p241 = scmp.lt.s32.totalorder %s20, 1
      %s242 = scalar_select %p241, %s20, 1
      %s243 = scalar_lea.vmem %s4, %s242
      %s244 = smul.u32 2, %s21
      %p245 = scmp.lt.s32.totalorder %s20, 1
      %s246 = scalar_select %p245, %s20, 1
      %p247 = scmp.lt.s32.totalorder %s244, 1
      %s248 = scalar_select %p247, %s244, 1
      %s249 = smul.addr %s246, 2
      %s250 = sadd.s32 %s248, %s249
      %s251 = smul.addr %s250, 4
      %s252 = scalar_lea.vmem %s0, %s251
      %s253 = smul.u32 2, %s21
      %s254 = smul.u32 2, %s21
      %p255 = scmp.lt.s32.totalorder %s20, 1
      %s256 = scalar_select %p255, %s20, 1
      %p257 = scmp.lt.s32.totalorder %s254, 1
      %s258 = scalar_select %p257, %s254, 1
      %s259 = smul.addr %s256, 2
      %s260 = sadd.s32 %s258, %s259
      %s261 = scalar_lea.vmem %s1, %s260
      %s262 = smul.u32 2, %s21
      %p263 = scmp.lt.s32.totalorder %s20, 1
      %s264 = scalar_select %p263, %s20, 1
      %s265 = scalar_lea.vmem %s2, %s264
      %p266 = scmp.lt.s32.totalorder %s20, 1
      %s267 = scalar_select %p266, %s20, 1
      %s268 = scalar_lea.vmem %s3, %s267
      %p269 = scmp.lt.s32.totalorder %s20, 1
      %s270 = scalar_select %p269, %s20, 1
      %s271 = scalar_lea.vmem %s4, %s270
      %p272 = scmp.eq.s32.totalorder %s21, 0
      // Predicated region
      $region29: #{dice_loss.1} parent=27 // pred_check
        %p273 = pneg %p272
      $region30: #{dice_loss.1} parent=27 // pred_check_branch
        %275 = sbr.rel (%p273) target = $region32
      $region31: #{dice_loss.1} parent=27 // pred_region
        %276 = vst [vmem:[#allocation2] sm:$0xff] 0.0
        %277 = vst [vmem:[#allocation3] sm:$0xff] 0.0
        %278 = vst [vmem:[#allocation4] sm:$0xff] 0.0
      $region32: #{dice_loss.1} parent=27 // pred_fallthru
        _
      %v279 = vld [vmem:[%s261] sm:$0x3]
      %s280 = smul.u32 %s21, 256
      %v281 = vlaneseq
      %v282 = vand.u32 %v281, 127
      %v283 = vadd.s32 %v282, 128
      %v284 = vstv %s280
      %v285 = vadd.s32 %v284, %v282
      %v286 = vadd.s32 %v284, %v283
      %vm287 = vcmp.lt.s32.totalorder %v285, 256
      %vm288 = vcmp.lt.s32.totalorder %v286, 256
      %v289 = vld [vmem:[%s252] sm:$0xff]
      %v290 = vsel %vm287, 1, 0
      %v291 = vsel %vm288, 1, 0
      %vm292 = vcmp.eq.s32.totalorder %v290, 1
      %vm293 = vcmp.eq.s32.totalorder %v291, 1
      %v295 = vcombine.high %v289, %v289
      %v297 = vsel %vm292, %v289, 0.0
      %v298 = vsel %vm293, %v295, 0.0
      %vm299 = vcmask 1043456
      %v300 = vsel %vm299, %v297, -inf
      %v301 = vrot.slane %v300, 4
      %v302 = vmax.f32 %v300, %v301
      %v303 = vrot.slane %v302, 2
      %v304 = vmax.f32 %v302, %v303
      %v305 = vrot.slane %v304, 1
      %v306 = vmax.f32 %v304, %v305
      %v307 = vsel %vm299, %v298, -inf
      %v308 = vrot.slane %v307, 4
      %v309 = vmax.f32 %v307, %v308
      %v310 = vrot.slane %v309, 2
      %v311 = vmax.f32 %v309, %v310
      %v312 = vrot.slane %v311, 1
      %v313 = vmax.f32 %v311, %v312
      %v314 = vsub.f32 %v297, %v306
      %v315 = vsub.f32 %v298, %v313
      %v316 = vmul.f32 %v314, 1.442695
      %v317 = vpow.pop %v316
      %v318 = vmul.f32 %v315, 1.442695
      %v319 = vpow.pop %v318
      %v320 = vsel %vm299, %v317, 0.0
      %v321 = vrot.slane %v320, 4
      %v322 = vadd.f32 %v320, %v321
      %v323 = vrot.slane %v322, 2
      %v324 = vadd.f32 %v322, %v323
      %v325 = vrot.slane %v324, 1
      %v326 = vadd.f32 %v324, %v325
      %v327 = vsel %vm299, %v319, 0.0
      %v328 = vrot.slane %v327, 4
      %v329 = vadd.f32 %v327, %v328
      %v330 = vrot.slane %v329, 2
      %v331 = vadd.f32 %v329, %v330
      %v332 = vrot.slane %v331, 1
      %v333 = vadd.f32 %v331, %v332
      %v334 = vrcp.pop %v326
      %v335 = vrcp.pop %v333
      %v336 = vmul.f32 %v317, %v334
      %v337 = vmul.f32 %v319, %v335
      %v338 = vsel %vm292, %v336, 0.0
      %v339 = vsel %vm293, %v337, 0.0
      %v340 = vlaneseq
      %v341 = vshrl.u32 %v340, 7
      %v342 = vlaneseq
      %v343 = vshrl.u32 %v342, 7
      %v344 = vsub.s32 0, %v343
      %v345 = vrot.slane %v279, %v344
      %v346 = vlaneseq
      %v347 = vshrl.u32 %v346, 7
      %v348 = vsub.s32 1, %v347
      %v349 = vrot.slane %v279, %v348
      %vm350 = vcmp.eq.s32.totalorder %v341, %v345
      %vm351 = vcmp.eq.s32.totalorder %v341, %v349
      %vm352 = vmand %vm350, %vm292
      %vm353 = vmand %vm351, %vm293
      %v354 = vsel %vm352, 1.0, 0.0
      %v355 = vsel %vm353, 1.0, 0.0
      %v356 = vld [vmem:[#allocation2] sm:$0xff]
      %v357 = vmul.f32 %v338, %v354
      %v358 = vmul.f32 %v339, %v355
      %v361 = vcombine.low %v357, %v358
      %v363 = vadd.f32 %v356, %v361
      %364 = vst [vmem:[#allocation2] sm:$0xff] %v363
      %v365 = vld [vmem:[#allocation3] sm:$0xff]
      %v368 = vcombine.low %v338, %v339
      %v370 = vadd.f32 %v365, %v368
      %371 = vst [vmem:[#allocation3] sm:$0xff] %v370
      %v372 = vld [vmem:[#allocation4] sm:$0xff]
      %v375 = vcombine.low %v354, %v355
      %v377 = vadd.f32 %v372, %v375
      %378 = vst [vmem:[#allocation4] sm:$0xff] %v377
      // Predicated region
      $region33: #{dice_loss.1} parent=27 // pred_check
        %p379 = pneg %p272
      $region34: #{dice_loss.1} parent=27 // pred_check_branch
        %381 = sbr.rel (%p379) target = $region36
      $region35: #{dice_loss.1} parent=27 // pred_region
        %v382 = vld [vmem:[#allocation2] sm:$0xff]
        %v384 = vcombine.high %v382, %v382
        %v386 = vsel %vm299, %v382, 0.0
        %v387 = vsel %vm299, %v384, 0.0
        %v388 = vadd.f32 %v386, %v387
        %389 = vadd.xlane.f32.xlu0 %v388
        %v390 = vpop.xlane.xlu0 %389
        %v391 = vrot.slane %v390, 4
        %v392 = vadd.f32 %v390, %v391
        %v393 = vrot.slane %v392, 2
        %v394 = vadd.f32 %v392, %v393
        %v395 = vrot.slane %v394, 1
        %v396 = vadd.f32 %v394, %v395
        %s397 = vtos %v396
        %v398 = vstv %s397
        %vm399 = vcmask 0
        %400 = vst.msk [vmem:[%s265] sm:$0x1] %vm399, %v398
        %v401 = vld [vmem:[#allocation3] sm:$0xff]
        %v403 = vcombine.high %v401, %v401
        %v405 = vsel %vm299, %v401, 0.0
        %v406 = vsel %vm299, %v403, 0.0
        %v407 = vadd.f32 %v405, %v406
        %408 = vadd.xlane.f32.xlu0 %v407
        %v409 = vpop.xlane.xlu0 %408
        %v410 = vrot.slane %v409, 4
        %v411 = vadd.f32 %v409, %v410
        %v412 = vrot.slane %v411, 2
        %v413 = vadd.f32 %v411, %v412
        %v414 = vrot.slane %v413, 1
        %v415 = vadd.f32 %v413, %v414
        %s416 = vtos %v415
        %v417 = vstv %s416
        %418 = vst.msk [vmem:[%s268] sm:$0x1] %vm399, %v417
        %v419 = vld [vmem:[#allocation4] sm:$0xff]
        %v421 = vcombine.high %v419, %v419
        %v423 = vsel %vm299, %v419, 0.0
        %v424 = vsel %vm299, %v421, 0.0
        %v425 = vadd.f32 %v423, %v424
        %426 = vadd.xlane.f32.xlu0 %v425
        %v427 = vpop.xlane.xlu0 %426
        %v428 = vrot.slane %v427, 4
        %v429 = vadd.f32 %v427, %v428
        %v430 = vrot.slane %v429, 2
        %v431 = vadd.f32 %v429, %v430
        %v432 = vrot.slane %v431, 1
        %v433 = vadd.f32 %v431, %v432
        %s434 = vtos %v433
        %v435 = vstv %s434
        %436 = vst.msk [vmem:[%s271] sm:$0x1] %vm399, %v435
      $region36: #{dice_loss.1} parent=27 // pred_fallthru
        _
      %p437 = scmp.lt.s32.totalorder %s20, 1
      %s438 = scalar_select %p437, %s20, 1
      %s439 = scalar_lea.vmem %s2, %s438
      %p440 = scmp.lt.s32.totalorder %s20, 1
      %s441 = scalar_select %p440, %s20, 1
      %s442 = scalar_lea.vmem %s3, %s441
      %p443 = scmp.lt.s32.totalorder %s20, 1
      %s444 = scalar_select %p443, %s20, 1
      %s445 = scalar_lea.vmem %s4, %s444
      // Predicated region
      $region37: #{dice_loss.1} parent=27 // pred_check
        %p446 = pneg %p102
      $region38: #{dice_loss.1} parent=27 // pred_check_branch
        %448 = sbr.rel (%p446) target = $region40
      $region39: #{dice_loss.1} parent=27 // pred_region
        _
      $region40: #{dice_loss.1} parent=27 // pred_fallthru
        _
      // Predicated region
      $region41: #{dice_loss.1} parent=27 // pred_check
        %p449 = pneg %p128
      $region42: #{dice_loss.1} parent=27 // pred_check_branch
        %451 = sbr.rel (%p449) target = $region44
      $region43: #{dice_loss.1} parent=27 // pred_region
        _
      $region44: #{dice_loss.1} parent=27 // pred_fallthru
        _
      // Predicated region
      $region45: #{dice_loss.1} parent=27 // pred_check
        %p452 = pneg %p154
      $region46: #{dice_loss.1} parent=27 // pred_check_branch
        %454 = sbr.rel (%p452) target = $region48
      $region47: #{dice_loss.1} parent=27 // pred_region
        _
      $region48: #{dice_loss.1} parent=27 // pred_fallthru
        _
    $region28: #{dice_loss.1} parent=5 // pred_fallthru
      _
    %p455 = scmp.le.s32.totalorder 2, %s11
    // Predicated region
    $region49: #{dice_loss.1} parent=5 // pred_check
      %p456 = pneg %p455
    $region50: #{dice_loss.1} parent=5 // pred_check_branch
      %458 = sbr.rel (%p456) target = $region52
    $region51: #{dice_loss.1} parent=5 // pred_region
      %s459 = ssub.s32 %s11, 2
      // Predicated region
      $region53: #{dice_loss.1} parent=51 // pred_check
        %p460 = pneg %p108
      $region54: #{dice_loss.1} parent=51 // pred_check_branch
        %462 = sbr.rel (%p460) target = $region56
      $region55: #{dice_loss.1} parent=51 // pred_region
        %p463 = scmp.lt.s32.totalorder %s22, 1
        %s464 = scalar_select %p463, %s22, 1
        %s465 = scalar_lea.vmem %s2, %s464
      $region56: #{dice_loss.1} parent=51 // pred_fallthru
        _
      // Predicated region
      $region57: #{dice_loss.1} parent=51 // pred_check
        %p466 = pneg %p134
      $region58: #{dice_loss.1} parent=51 // pred_check_branch
        %468 = sbr.rel (%p466) target = $region60
      $region59: #{dice_loss.1} parent=51 // pred_region
        %p469 = scmp.lt.s32.totalorder %s22, 1
        %s470 = scalar_select %p469, %s22, 1
        %s471 = scalar_lea.vmem %s3, %s470
      $region60: #{dice_loss.1} parent=51 // pred_fallthru
        _
      // Predicated region
      $region61: #{dice_loss.1} parent=51 // pred_check
        %p472 = pneg %p160
      $region62: #{dice_loss.1} parent=51 // pred_check_branch
        %474 = sbr.rel (%p472) target = $region64
      $region63: #{dice_loss.1} parent=51 // pred_region
        %p475 = scmp.lt.s32.totalorder %s22, 1
        %s476 = scalar_select %p475, %s22, 1
        %s477 = scalar_lea.vmem %s4, %s476
      $region64: #{dice_loss.1} parent=51 // pred_fallthru
        _
    $region52: #{dice_loss.1} parent=5 // pred_fallthru
      _
  $region6: #{dice_loss.1} parent=0 // loop_footer
    %s15 = sadd.s32 1, %s11
  $region7: #{dice_loss.1} parent=0 // loop_footer_branch
    %10 = sbr.rel target = $region3
  $region8: #{dice_loss.1} parent=0 // loop_exit
    _

</llo_original>
